<compile_context>
chip_gen: v6e
topology: v6e:2x2x1
jax: 0.10.0
libtpu: 0.0.40
codegen_flags: <defaults>
</compile_context>

<pallas_src>
import jax
import jax.numpy as jnp
from jax import lax
from jax.experimental import pallas as pl
from jax.experimental.pallas import tpu as pltpu

# ----------------------------------------------------------------------------
# Hyper-parameters (module defaults, small demo arg sizes).
# ----------------------------------------------------------------------------
NCHANS = 4          # args.nchans
NTIMES = 16         # args.ntimes
F1 = 8
D = 2
F2 = F1 * D
DEPTH = 24          # temporal kernel length
LATENT = 32         # latent_dim (reduced from 128 for the small demo)
PAD = DEPTH // 2
BN_EPS = 1e-3

TP = NTIMES + 2 * PAD            # padded time length (folded into Wbig)
W1 = TP - DEPTH + 1              # width after temporal conv  (= NTIMES + 1)
POOL = 4
W2 = (W1 - POOL) // POOL + 1     # width after AvgPool2d((1,4), stride=4)
FEAT = F2 * W2                   # flattened feature dim fed to the linear layer
K_IN = NCHANS * NTIMES           # contraction size of matmul-1 (unpadded x)
N_OUT = F2 * W1                  # intermediate width (filters x conv positions)
N_PAD = ((N_OUT + 127) // 128) * 128       # lane-dense intermediate (384)
LATENT_PAD = ((LATENT + 127) // 128) * 128  # lane-dense output store (>=128)
MAX_BT = 512                     # batch-block cap (samples per grid step)


def _round_up(n, m):
    return -(-n // m) * m


def _choose_bt(batch):
    """Batch block: multiple of 8, capped at MAX_BT, >=2 grid steps when possible."""
    bp = _round_up(batch, 8)
    if bp <= 8:
        return bp
    bt = _round_up(pl.cdiv(bp, 2), 8)    # split into >=2 steps (2 TCs on v7x)
    return min(bt, MAX_BT)


# ----------------------------------------------------------------------------
# Pallas kernel: fused forward pass for a block of BT batch samples.
# ----------------------------------------------------------------------------
def _shallow_convnet_kernel(x_ref, wbig_ref, bias_ref, m_ref, o_ref):
    # Stage 1: conv1 + BN1 + grouped conv2 + BN2-scale (and the time padding)
    # folded into one MXU matmul with batch on the sublane axis.
    z = jnp.dot(x_ref[...], wbig_ref[...],
                preferred_element_type=jnp.float32)          # (BT, N_PAD)

    # Folded bias (BN1 bias pushed through conv2 + BN2, plus BN2 bias) as a
    # lane vector: single VPU vadd broadcast over sublanes.
    z = z + bias_ref[...]                                     # (1, N_PAD)

    # ELU.
    # TODO(synk): torch ELU is expm1-based; exp(z)-1 kept for guaranteed Mosaic
    #             lowering (difference is far below the test tolerance here).
    z = jnp.where(z > 0.0, z, jnp.exp(z) - 1.0)

    # Dropout(p=0.25) is identity at inference.
    # Stage 2: AvgPool2d((1,4),4) + flatten + Linear folded into one matmul.
    o_ref[...] = jnp.dot(z, m_ref[...],
                         preferred_element_type=jnp.float32)  # (BT, LATENT_PAD)


# ----------------------------------------------------------------------------
# Host-side parameter folding.
# ----------------------------------------------------------------------------
def _renorm(w, maxnorm=1.0):
    # torch.renorm(w, p=2, dim=0, maxnorm): rescale each slice along dim 0
    # whose L2 norm exceeds maxnorm (torch uses a 1e-7 guard).
    norms = jnp.sqrt(jnp.sum(w.astype(jnp.float32) ** 2, axis=(1, 2, 3), keepdims=True))
    scale = jnp.where(norms > maxnorm, maxnorm / (norms + 1e-7), 1.0)
    return w * scale


def _fold_params(params):
    """Build Wbig:(K_IN,N_PAD), bias:(1,N_PAD), Mbig:(N_PAD,LATENT_PAD)."""
    # ---- conv1 + BN1 + conv2(renormed) + BN2 scales ----
    w1r = params['w_conv1'].reshape(F1, DEPTH)
    g1, be1, m1, v1 = params['bn1']
    s1 = g1 / jnp.sqrt(v1 + BN_EPS)
    b1 = be1 - m1 * s1
    w2r = _renorm(params['w_conv2']).reshape(F1, D, NCHANS)
    g2, be2, m2, v2 = params['bn2']
    s2 = g2 / jnp.sqrt(v2 + BN_EPS)
    b2 = be2 - m2 * s2
    # TODO(synk): BatchNorm is implemented in eval mode (running stats);
    #             training-mode batch statistics are not reproduced.

    # wcomb[j=f*D+d, k, c] = s2[j] * s1[f] * w1[f,k] * w2[f,d,c]
    wc4 = jnp.einsum('fk,fdc->fdkc', s1[:, None] * w1r, w2r)       # (F1,D,DEPTH,NCHANS)
    wcomb_jkc = (s2.reshape(F1, D, 1, 1) * wc4).reshape(F2, DEPTH, NCHANS)

    # bias[j] = s2[j] * b1[f] * sum_c w2[f,d,c] + b2[j]
    bias_j = (s2.reshape(F1, D) * (b1[:, None] * w2r.sum(-1))
              + b2.reshape(F1, D)).reshape(F2)

    # Banded big weight folding im2col + zero padding:
    #   Wbig[c*NTIMES + t, j*W1 + w] = wcomb[j, t + PAD - w, c]  if in-band else 0
    t_idx = jnp.arange(NTIMES)[:, None]
    w_idx = jnp.arange(W1)[None, :]
    kband = t_idx + PAD - w_idx                                    # (NTIMES, W1)
    valid = (kband >= 0) & (kband < DEPTH)
    kc = jnp.clip(kband, 0, DEPTH - 1)
    gath = wcomb_jkc[:, kc, :]                                     # (F2,NTIMES,W1,NCHANS)
    gath = jnp.where(valid[None, :, :, None], gath, 0.0)
    wbig = jnp.transpose(gath, (3, 1, 0, 2)).reshape(K_IN, N_OUT)
    wbig = jnp.pad(wbig, ((0, 0), (0, N_PAD - N_OUT))).astype(jnp.float32)

    # Bias lane vector (padding columns stay 0 -> ELU(0)=0 -> no contribution).
    bias_vec = jnp.pad(jnp.repeat(bias_j, W1)[None, :],
                       ((0, 0), (0, N_PAD - N_OUT))).astype(jnp.float32)

    # AvgPool2d((1,4),4) + flatten + Linear folded into Mbig.
    # TODO(synk): at large ntimes keep the pooling as a separate in-kernel stage
    #             (4 strided lane-slice adds) instead of folding it into Mbig —
    #             folding multiplies the linear-weight VMEM footprint by POOL,
    #             which matters first on v7x's 64 MiB VMEM.
    t_idx2 = jnp.arange(W1)[:, None]
    p_idx = jnp.arange(W2)[None, :]
    pool_mat = jnp.where((t_idx2 >= POOL * p_idx) & (t_idx2 < POOL * p_idx + POOL),
                         1.0 / POOL, 0.0).astype(jnp.float32)      # (W1, W2)
    wlin3 = params['w_lin'].T.reshape(F2, W2, LATENT).astype(jnp.float32)
    m_full = jnp.einsum('tp,jpl->jtl', pool_mat, wlin3)            # (F2, W1, LATENT)
    m_big = m_full.reshape(N_OUT, LATENT)
    m_big = jnp.pad(m_big, ((0, N_PAD - N_OUT),
                            (0, LATENT_PAD - LATENT))).astype(jnp.float32)
    return wbig, bias_vec, m_big


# ----------------------------------------------------------------------------
# Host-side wrapper.
# ----------------------------------------------------------------------------
def shallow_convnet_forward(x, params):
    """x: (B, 1, NCHANS, NTIMES) — PyTorch NCHW.  Returns (B, LATENT) f32."""
    B = x.shape[0]
    x = x.astype(jnp.float32)                              # x.float()
    x_flat = x[:, 0, :, :].reshape(B, K_IN)                # (B, NCHANS*NTIMES), unpadded

    BT = _choose_bt(B)
    Bp = _round_up(B, BT)
    if Bp != B:
        x_flat = jnp.pad(x_flat, ((0, Bp - B), (0, 0)))

    wbig, bias_vec, m_big = _fold_params(params)

    grid_spec = pltpu.PrefetchScalarGridSpec(
        num_scalar_prefetch=0,
        grid=(Bp // BT,),
        in_specs=[
            pl.BlockSpec((BT, K_IN), lambda b: (b, 0)),            # x batch block
            # Weights: constant index_map -> fetched once, stay VMEM-resident.
            pl.BlockSpec((K_IN, N_PAD), lambda b: (0, 0)),         # banded conv weight
            pl.BlockSpec((1, N_PAD), lambda b: (0, 0)),            # fused bias lane vec
            pl.BlockSpec((N_PAD, LATENT_PAD), lambda b: (0, 0)),   # pool+linear weight
        ],
        out_specs=pl.BlockSpec((BT, LATENT_PAD), lambda b: (b, 0)),  # lane-dense output
    )

    out = pl.pallas_call(
        _shallow_convnet_kernel,
        out_shape=jax.ShapeDtypeStruct((Bp, LATENT_PAD), jnp.float32),
        grid_spec=grid_spec,
        compiler_params=pltpu.CompilerParams(
            dimension_semantics=("parallel",)),   # independent batch blocks (2 TCs on v7x)
    )(x_flat, wbig, bias_vec, m_big)
    return out[:B, :LATENT]


# ----------------------------------------------------------------------------
# Deterministic parameter init (shapes from the module's __init__).
# ----------------------------------------------------------------------------
def init_params(key):
    ks = jax.random.split(key, 11)
    w_conv1 = 0.25 * jax.random.normal(ks[0], (F1, 1, 1, DEPTH), jnp.float32)
    w_conv2 = 0.80 * jax.random.normal(ks[1], (F2, 1, NCHANS, 1), jnp.float32)
    w_lin = 0.10 * jax.random.normal(ks[2], (LATENT, FEAT), jnp.float32)
    bn1 = (1.0 + 0.1 * jax.random.normal(ks[3], (F1,), jnp.float32),     # gamma
           0.1 * jax.random.normal(ks[4], (F1,), jnp.float32),           # beta
           0.1 * jax.random.normal(ks[5], (F1,), jnp.float32),           # running_mean
           0.5 + jnp.abs(jax.random.normal(ks[6], (F1,), jnp.float32)))  # running_var
    bn2 = (1.0 + 0.1 * jax.random.normal(ks[7], (F2,), jnp.float32),
           0.1 * jax.random.normal(ks[8], (F2,), jnp.float32),
           0.1 * jax.random.normal(ks[9], (F2,), jnp.float32),
           0.5 + jnp.abs(jax.random.normal(ks[10], (F2,), jnp.float32)))
    return {'w_conv1': w_conv1, 'w_conv2': w_conv2, 'w_lin': w_lin,
            'bn1': bn1, 'bn2': bn2}


# ----------------------------------------------------------------------------
# Pure-JAX reference (plain XLA, high precision) for correctness check.
# ----------------------------------------------------------------------------
def reference_forward(x, params):
    hi = lax.Precision.HIGHEST
    x = x.astype(jnp.float32)
    y = lax.conv_general_dilated(x, params['w_conv1'], (1, 1),
                                 ((0, 0), (PAD, PAD)),
                                 dimension_numbers=('NCHW', 'OIHW', 'NCHW'),
                                 precision=hi)
    g1, be1, m1, v1 = params['bn1']
    y = (g1[None, :, None, None] * (y - m1[None, :, None, None])
         / jnp.sqrt(v1 + BN_EPS)[None, :, None, None] + be1[None, :, None, None])
    y = lax.conv_general_dilated(y, _renorm(params['w_conv2']), (1, 1),
                                 ((0, 0), (0, 0)),
                                 dimension_numbers=('NCHW', 'OIHW', 'NCHW'),
                                 feature_group_count=F1, precision=hi)
    g2, be2, m2, v2 = params['bn2']
    y = (g2[None, :, None, None] * (y - m2[None, :, None, None])
         / jnp.sqrt(v2 + BN_EPS)[None, :, None, None] + be2[None, :, None, None])
    y = jnp.where(y > 0, y, jnp.exp(y) - 1.0)                             # ELU
    y = y[..., :W2 * POOL].reshape(y.shape[0], F2, 1, W2, POOL).mean(-1)  # AvgPool
    y = y.reshape(y.shape[0], -1)                                         # flatten
    return jnp.dot(y, params['w_lin'].T, precision=hi)


if __name__ == "__main__":
    key = jax.random.PRNGKey(0)
    kx, kp = jax.random.split(key)
    x = jax.random.normal(kx, (2, 1, NCHANS, NTIMES), jnp.float32)
    params = init_params(kp)

    out = shallow_convnet_forward(x, params)
    out = jax.block_until_ready(out)
    assert out.shape == (2, LATENT) and out.dtype == jnp.float32

    ref = reference_forward(x, params)
    # Kernel matmuls run at default MXU precision, so allow for bf16-pass
    # rounding vs. the f32-HIGHEST reference.
    if not bool(jnp.allclose(out, ref, atol=2e-2, rtol=2e-2)):
        raise RuntimeError(f"mismatch: max abs err {float(jnp.max(jnp.abs(out - ref)))}")
    print("KERNEL_OK")
</pallas_src>

<mosaic_0001>
module attributes {stable_mosaic.version = 11 : i64} {
  func.func @_shallow_convnet_kernel(%arg0: i32, %arg1: memref<8x64xf32, #tpu.memory_space<vmem>>, %arg2: memref<64x384xf32, #tpu.memory_space<vmem>>, %arg3: memref<1x384xf32, #tpu.memory_space<vmem>>, %arg4: memref<384x128xf32, #tpu.memory_space<vmem>>, %arg5: memref<8x128xf32, #tpu.memory_space<vmem>>) attributes {dimension_semantics = [#tpu.dimension_semantics<parallel>], iteration_bounds = array<i64: 1>, scalar_prefetch = 0 : i64, scratch_operands = 0 : i64, tpu.core_type = #tpu.core_type<tc>, window_params = [{transform_indices = @transform_0, window_bounds = array<i64: 8, 64>}, {pipeline_mode = #tpu.pipeline_mode<synchronous>, transform_indices = @transform_1, window_bounds = array<i64: 64, 384>}, {pipeline_mode = #tpu.pipeline_mode<synchronous>, transform_indices = @transform_2, window_bounds = array<i64: 1, 384>}, {pipeline_mode = #tpu.pipeline_mode<synchronous>, transform_indices = @transform_3, window_bounds = array<i64: 384, 128>}, {transform_indices = @transform_4, window_bounds = array<i64: 8, 128>}]} {
    %c0 = arith.constant 0 : index
    %c0_0 = arith.constant 0 : index
    %0 = vector.load %arg1[%c0, %c0_0] : memref<8x64xf32, #tpu.memory_space<vmem>>, vector<8x64xf32>
    %c0_1 = arith.constant 0 : index
    %c0_2 = arith.constant 0 : index
    %1 = vector.load %arg2[%c0_1, %c0_2] : memref<64x384xf32, #tpu.memory_space<vmem>>, vector<64x384xf32>
    %cst = arith.constant dense<0.000000e+00> : vector<8x384xf32>
    %2 = tpu.matmul %0, %1, %cst {dimension_numbers = #tpu.dot_dimension_numbers<[1], [0], [0], [1], [0, 0, 1, 1], [], []>} : vector<8x64xf32>, vector<64x384xf32>, vector<8x384xf32> -> vector<8x384xf32>
    %c0_3 = arith.constant 0 : index
    %c0_4 = arith.constant 0 : index
    %3 = vector.load %arg3[%c0_3, %c0_4] : memref<1x384xf32, #tpu.memory_space<vmem>>, vector<1x384xf32>
    %4 = vector.broadcast %3 : vector<1x384xf32> to vector<8x384xf32>
    %5 = arith.addf %2, %4 : vector<8x384xf32>
    %cst_5 = arith.constant 0.000000e+00 : f32
    %6 = vector.broadcast %cst_5 : f32 to vector<8x384xf32>
    %7 = arith.cmpf ogt, %5, %6 : vector<8x384xf32>
    %8 = math.exp %5 : vector<8x384xf32>
    %cst_6 = arith.constant 1.000000e+00 : f32
    %9 = vector.broadcast %cst_6 : f32 to vector<8x384xf32>
    %10 = arith.subf %8, %9 : vector<8x384xf32>
    %11 = arith.select %7, %5, %10 : vector<8x384xi1>, vector<8x384xf32>
    %c0_7 = arith.constant 0 : index
    %c0_8 = arith.constant 0 : index
    %12 = vector.load %arg4[%c0_7, %c0_8] : memref<384x128xf32, #tpu.memory_space<vmem>>, vector<384x128xf32>
    %cst_9 = arith.constant dense<0.000000e+00> : vector<8x128xf32>
    %13 = tpu.matmul %11, %12, %cst_9 {dimension_numbers = #tpu.dot_dimension_numbers<[1], [0], [0], [1], [0, 0, 1, 1], [], []>} : vector<8x384xf32>, vector<384x128xf32>, vector<8x128xf32> -> vector<8x128xf32>
    %c0_10 = arith.constant 0 : index
    %c0_11 = arith.constant 0 : index
    %14 = vector.load %arg5[%c0_10, %c0_11] : memref<8x128xf32, #tpu.memory_space<vmem>>, vector<8x128xf32>
    tpu.vector_store %arg5[%c0_10, %c0_11], %13 {strides = array<i32>} : memref<8x128xf32, #tpu.memory_space<vmem>>, vector<8x128xf32>,
    return
  }
  func.func @transform_0(%arg0: i32) -> (i32, i32) {
    %c0_i32 = arith.constant 0 : i32
    %c0_i32_0 = arith.constant 0 : i32
    return %arg0, %c0_i32 : i32, i32
  }
  func.func @transform_1(%arg0: i32) -> (i32, i32) {
    %c0_i32 = arith.constant 0 : i32
    %c0_i32_0 = arith.constant 0 : i32
    %c0_i32_1 = arith.constant 0 : i32
    return %c0_i32, %c0_i32_0 : i32, i32
  }
  func.func @transform_2(%arg0: i32) -> (i32, i32) {
    %c0_i32 = arith.constant 0 : i32
    %c0_i32_0 = arith.constant 0 : i32
    %c0_i32_1 = arith.constant 0 : i32
    return %c0_i32, %c0_i32_0 : i32, i32
  }
  func.func @transform_3(%arg0: i32) -> (i32, i32) {
    %c0_i32 = arith.constant 0 : i32
    %c0_i32_0 = arith.constant 0 : i32
    %c0_i32_1 = arith.constant 0 : i32
    return %c0_i32, %c0_i32_0 : i32, i32
  }
  func.func @transform_4(%arg0: i32) -> (i32, i32) {
    %c0_i32 = arith.constant 0 : i32
    %c0_i32_0 = arith.constant 0 : i32
    return %arg0, %c0_i32 : i32, i32
  }
}

</mosaic_0001>

<llo_original>
// kernel: tpu_custom_call.1
$region0: #{tpu_custom_call.1}
  #allocation0 [shape = 'u32[]', space=smem, size = 0x4, offset = 0x4, fixed_abs, tag = 'smem constant byte address 0x4 - core index']
  #allocation1 [shape = 'u32[144,128]{1,0:T(1,128)}', space=vmem, size = 0x12000, scoped, tag = 'internal scratch']
  %s0 = inlined_call_operand.hbm [shape: f32[8,64], index: 0, kind: input, shape index: {}]
  %s1 = inlined_call_operand.hbm [shape: f32[64,384], index: 1, kind: input, shape index: {}]
  %s2 = inlined_call_operand.vmem [shape: f32[1,384], index: 2, kind: input, shape index: {}]
  %s3 = inlined_call_operand.hbm [shape: f32[384,128], index: 3, kind: input, shape index: {}]
  %s4 = inlined_call_operand.hbm [shape: f32[8,128], index: 4, kind: output, shape index: {}]
  %s5 = sld [smem:[#allocation0]]
  $region38: #{tpu_custom_call.1} parent=0
    _
  %s7 = ssub.s32 1, %s5
  %s8 = scalar_select 0, %s7, %s5
  $region1: #{tpu_custom_call.1} parent=0
    #allocation2 [shape = 'u8[4096]{0}', space=vmem, size = 0x1000, scoped, tag = 'input window, operand 0, single buffered']
    #allocation3 [shape = 's32[1]{0}', space=sflag, size = 0x4, scoped, tag = 'scoped memory for tpu_custom_call.1']
    #allocation4 [shape = 's32[1]{0}', space=sflag, size = 0x4, scoped, tag = 'scoped memory for tpu_custom_call.1']
    #allocation5 [shape = 'u8[98304]{0}', space=vmem, size = 0x18000, scoped, tag = 'input window, operand 1, single buffered']
    #allocation6 [shape = 's32[1]{0}', space=sflag, size = 0x4, scoped, tag = 'scoped memory for tpu_custom_call.1']
    #allocation7 [shape = 'u8[196608]{0}', space=vmem, size = 0x30000, scoped, tag = 'input window, operand 3, single buffered']
    #allocation8 [shape = 'u8[4096]{0}', space=vmem, size = 0x1000, scoped, tag = 'output window, operand 0, single buffered']
    %9 = vsyncpa [#allocation3], 0
    %10 = vsyncpa [#allocation6], 0
    %11 = vsyncpa [#allocation4], 0
    // Predicated region
    $region2: #{tpu_custom_call.1} parent=1 // pred_check
      _
    $region3: #{tpu_custom_call.1} parent=1 // pred_check_branch
      %13 = sbr.rel (0) target = $region5
    $region4: #{tpu_custom_call.1} parent=1 // pred_region
      %s15 = ssub.s32 128, 128
      %16 = vsyncadd [#allocation3], %s15
      %s18 = sshll.u32 [#allocation2], 4
      %s19 = int_to_ptr.vmem [resolvable:$true] %s18
      %21 = dma.hbm_to_vmem [thread:$0]  %s0, 128, %s19, [#allocation3]
    $region5: #{tpu_custom_call.1} parent=1 // pred_fallthru
      _
    // Predicated region
    $region6: #{tpu_custom_call.1} parent=1 // pred_check
      _
    $region7: #{tpu_custom_call.1} parent=1 // pred_check_branch
      %23 = sbr.rel (0) target = $region9
    $region8: #{tpu_custom_call.1} parent=1 // pred_region
      %s25 = ssub.s32 3072, 3072
      %26 = vsyncadd [#allocation6], %s25
      %s27 = sshll.u32 [#allocation5], 4
      %s28 = int_to_ptr.vmem [resolvable:$true] %s27
      %33 = dma.hbm_to_vmem [thread:$0]  %s1, 3072, %s28, [#allocation6], 384, 384, 24
    $region9: #{tpu_custom_call.1} parent=1 // pred_fallthru
      _
    // Predicated region
    $region10: #{tpu_custom_call.1} parent=1 // pred_check
      _
    $region11: #{tpu_custom_call.1} parent=1 // pred_check_branch
      %35 = sbr.rel (0) target = $region13
    $region12: #{tpu_custom_call.1} parent=1 // pred_region
      _
    $region13: #{tpu_custom_call.1} parent=1 // pred_fallthru
      _
    // Predicated region
    $region14: #{tpu_custom_call.1} parent=1 // pred_check
      _
    $region15: #{tpu_custom_call.1} parent=1 // pred_check_branch
      %37 = sbr.rel (0) target = $region17
    $region16: #{tpu_custom_call.1} parent=1 // pred_region
      %s39 = ssub.s32 6144, 6144
      %40 = vsyncadd [#allocation6], %s39
      %s41 = sshll.u32 [#allocation7], 4
      %s42 = int_to_ptr.vmem [resolvable:$true] %s41
      %47 = dma.hbm_to_vmem [thread:$0]  %s3, 6144, %s42, [#allocation6], 128, 128, 8
    $region17: #{tpu_custom_call.1} parent=1 // pred_fallthru
      _
    // Predicated region
    $region18: #{tpu_custom_call.1} parent=1 // pred_check
      _
    $region19: #{tpu_custom_call.1} parent=1 // pred_check_branch
      %49 = sbr.rel (0) target = $region21
    $region20: #{tpu_custom_call.1} parent=1 // pred_region
      %50 = dma.done [#allocation3], 128
    $region21: #{tpu_custom_call.1} parent=1 // pred_fallthru
      _
    // Predicated region
    $region22: #{tpu_custom_call.1} parent=1 // pred_check
      _
    $region23: #{tpu_custom_call.1} parent=1 // pred_check_branch
      %52 = sbr.rel (0) target = $region25
    $region24: #{tpu_custom_call.1} parent=1 // pred_region
      %53 = dma.done [#allocation6], 3072
    $region25: #{tpu_custom_call.1} parent=1 // pred_fallthru
      _
    // Predicated region
    $region26: #{tpu_custom_call.1} parent=1 // pred_check
      _
    $region27: #{tpu_custom_call.1} parent=1 // pred_check_branch
      %55 = sbr.rel (0) target = $region29
    $region28: #{tpu_custom_call.1} parent=1 // pred_region
      %56 = dma.done [#allocation6], 6144
    $region29: #{tpu_custom_call.1} parent=1 // pred_fallthru
      _
    %v57 = vld [vmem:[#allocation2] sm:$0xff]
    %v58 = vld [vmem:[#allocation5] sm:$0xff]
    %v59 = vld [vmem:[#allocation5 + $0x8] sm:$0xff]
    %v60 = vld [vmem:[#allocation5 + $0x10] sm:$0xff]
    %v61 = vld [vmem:[#allocation5 + $0x18] sm:$0xff]
    %v62 = vld [vmem:[#allocation5 + $0x20] sm:$0xff]
    %v63 = vld [vmem:[#allocation5 + $0x28] sm:$0xff]
    %v64 = vld [vmem:[#allocation5 + $0x30] sm:$0xff]
    %v65 = vld [vmem:[#allocation5 + $0x38] sm:$0xff]
    %v66 = vld [vmem:[#allocation5 + $0x40] sm:$0xff]
    %v67 = vld [vmem:[#allocation5 + $0x48] sm:$0xff]
    %v68 = vld [vmem:[#allocation5 + $0x50] sm:$0xff]
    %v69 = vld [vmem:[#allocation5 + $0x58] sm:$0xff]
    %v70 = vld [vmem:[#allocation5 + $0x60] sm:$0xff]
    %v71 = vld [vmem:[#allocation5 + $0x68] sm:$0xff]
    %v72 = vld [vmem:[#allocation5 + $0x70] sm:$0xff]
    %v73 = vld [vmem:[#allocation5 + $0x78] sm:$0xff]
    %v74 = vld [vmem:[#allocation5 + $0x80] sm:$0xff]
    %v75 = vld [vmem:[#allocation5 + $0x88] sm:$0xff]
    %v76 = vld [vmem:[#allocation5 + $0x90] sm:$0xff]
    %v77 = vld [vmem:[#allocation5 + $0x98] sm:$0xff]
    %v78 = vld [vmem:[#allocation5 + $0xa0] sm:$0xff]
    %v79 = vld [vmem:[#allocation5 + $0xa8] sm:$0xff]
    %v80 = vld [vmem:[#allocation5 + $0xb0] sm:$0xff]
    %v81 = vld [vmem:[#allocation5 + $0xb8] sm:$0xff]
    %v82 = vld [vmem:[%s2] sm:$0x7]
    %v84 = vlaneseq
    %v85 = vshrl.u32 %v84, 7
    %v86 = vsub.s32 0, %v85
    %v87 = vrot.slane %v82, %v86
    %v88 = vlaneseq
    %v89 = vshrl.u32 %v88, 7
    %v90 = vsub.s32 1, %v89
    %v91 = vrot.slane %v82, %v90
    %v92 = vlaneseq
    %v93 = vshrl.u32 %v92, 7
    %v94 = vsub.s32 2, %v93
    %v95 = vrot.slane %v82, %v94
    %vm99 = vcmask 523264
    %v101 = vsel %vm99, %v57, 0
    %103 = vmatprep.subr.mxu0 0.0
    %104 = vmatpush1.msra.mxu0 0.0
    %105 = vmatprep.subr.mxu0 0.0
    %106 = vmatpush1.msra.mxu0 0.0
    %107 = vmatprep.subr.mxu0 0.0
    %108 = vmatpush1.msra.mxu0 0.0
    %109 = vmatprep.subr.mxu0 0.0
    %110 = vmatpush1.msra.mxu0 0.0
    %111 = vmatprep.subr.mxu0 0.0
    %112 = vmatpush1.msra.mxu0 0.0
    %113 = vmatprep.subr.mxu0 0.0
    %114 = vmatpush1.msra.mxu0 0.0
    %115 = vmatprep.subr.mxu0 0.0
    %116 = vmatpush1.msra.mxu0 0.0
    %117 = vmatprep.subr.mxu0 0.0
    %118 = vmatpush1.msra.mxu0 0.0
    %119 = vmatprep.subr.mxu0 %v80
    %120 = vmatpush1.msra.mxu0 %v79
    %121 = vmatprep.subr.mxu0 %v77
    %122 = vmatpush1.msra.mxu0 %v76
    %123 = vmatprep.subr.mxu0 %v74
    %124 = vmatpush1.msra.mxu0 %v73
    %125 = vmatprep.subr.mxu0 %v71
    %126 = vmatpush1.msra.mxu0 %v70
    %127 = vmatprep.subr.mxu0 %v68
    %128 = vmatpush1.msra.mxu0 %v67
    %129 = vmatprep.subr.mxu0 %v65
    %130 = vmatpush1.msra.mxu0 %v64
    %131 = vmatprep.subr.mxu0 %v62
    %132 = vmatpush1.msra.mxu0 %v61
    %133 = vmatprep.subr.mxu0 %v59
    %134 = vmatpush1.msra.mxu0 %v58
    %135 = vmatprep.subr.mxu0 0.0
    %136 = vmatpush2.msra.mxu0 0.0
    %137 = vmatprep.subr.mxu0 0.0
    %138 = vmatpush2.msra.mxu0 0.0
    %139 = vmatprep.subr.mxu0 0.0
    %140 = vmatpush2.msra.mxu0 0.0
    %141 = vmatprep.subr.mxu0 0.0
    %142 = vmatpush2.msra.mxu0 0.0
    %143 = vmatprep.subr.mxu0 0.0
    %144 = vmatpush2.msra.mxu0 0.0
    %145 = vmatprep.subr.mxu0 0.0
    %146 = vmatpush2.msra.mxu0 0.0
    %147 = vmatprep.subr.mxu0 0.0
    %148 = vmatpush2.msra.mxu0 0.0
    %149 = vmatprep.subr.mxu0 0.0
    %150 = vmatpush2.msra.mxu0 0.0
    %151 = vmatprep.subr.mxu0 0.0
    %152 = vmatpush2.msra.mxu0 0.0
    %153 = vmatprep.subr.mxu0 0.0
    %154 = vmatpush2.msra.mxu0 0.0
    %155 = vmatprep.subr.mxu0 0.0
    %156 = vmatpush2.msra.mxu0 0.0
    %157 = vmatprep.subr.mxu0 0.0
    %158 = vmatpush2.msra.mxu0 0.0
    %159 = vmatprep.subr.mxu0 0.0
    %160 = vmatpush2.msra.mxu0 0.0
    %161 = vmatprep.subr.mxu0 0.0
    %162 = vmatpush2.msra.mxu0 0.0
    %163 = vmatprep.subr.mxu0 0.0
    %164 = vmatpush2.msra.mxu0 0.0
    %165 = vmatprep.subr.mxu0 0.0
    %166 = vmatpush2.msra.mxu0 0.0
    %167 = vmatprep.mubr.f32.mxu0 0.0
    %168 = vmatmul.mubr.f32.gmra.mxu0 %v101
    %v169 = vpop.f32.mrf.mxu0
    %v170 = vadd.f32 %v87, %v169
    %v171 = vpop.f32.mrf.mxu0
    %v172 = vadd.f32 %v91, %v171
    %173 = vdwg.mxu0
    %174 = vmatprep.subr.mxu0 0.0
    %175 = vmatpush1.msra.mxu0 0.0
    %176 = vmatprep.subr.mxu0 0.0
    %177 = vmatpush1.msra.mxu0 0.0
    %178 = vmatprep.subr.mxu0 0.0
    %179 = vmatpush1.msra.mxu0 0.0
    %180 = vmatprep.subr.mxu0 0.0
    %181 = vmatpush1.msra.mxu0 0.0
    %182 = vmatprep.subr.mxu0 0.0
    %183 = vmatpush1.msra.mxu0 0.0
    %184 = vmatprep.subr.mxu0 0.0
    %185 = vmatpush1.msra.mxu0 0.0
    %186 = vmatprep.subr.mxu0 0.0
    %187 = vmatpush1.msra.mxu0 0.0
    %188 = vmatprep.subr.mxu0 0.0
    %189 = vmatpush1.msra.mxu0 0.0
    %190 = vmatprep.subr.mxu0 0.0
    %191 = vmatpush1.msra.mxu0 %v81
    %192 = vmatprep.subr.mxu0 0.0
    %193 = vmatpush1.msra.mxu0 %v78
    %194 = vmatprep.subr.mxu0 0.0
    %195 = vmatpush1.msra.mxu0 %v75
    %196 = vmatprep.subr.mxu0 0.0
    %197 = vmatpush1.msra.mxu0 %v72
    %198 = vmatprep.subr.mxu0 0.0
    %199 = vmatpush1.msra.mxu0 %v69
    %200 = vmatprep.subr.mxu0 0.0
    %201 = vmatpush1.msra.mxu0 %v66
    %202 = vmatprep.subr.mxu0 0.0
    %203 = vmatpush1.msra.mxu0 %v63
    %204 = vmatprep.subr.mxu0 0.0
    %205 = vmatpush1.msra.mxu0 %v60
    %206 = vmatprep.subr.mxu0 0.0
    %207 = vmatpush2.msra.mxu0 0.0
    %208 = vmatprep.subr.mxu0 0.0
    %209 = vmatpush2.msra.mxu0 0.0
    %210 = vmatprep.subr.mxu0 0.0
    %211 = vmatpush2.msra.mxu0 0.0
    %212 = vmatprep.subr.mxu0 0.0
    %213 = vmatpush2.msra.mxu0 0.0
    %214 = vmatprep.subr.mxu0 0.0
    %215 = vmatpush2.msra.mxu0 0.0
    %216 = vmatprep.subr.mxu0 0.0
    %217 = vmatpush2.msra.mxu0 0.0
    %218 = vmatprep.subr.mxu0 0.0
    %219 = vmatpush2.msra.mxu0 0.0
    %220 = vmatprep.subr.mxu0 0.0
    %221 = vmatpush2.msra.mxu0 0.0
    %222 = vmatprep.subr.mxu0 0.0
    %223 = vmatpush2.msra.mxu0 0.0
    %224 = vmatprep.subr.mxu0 0.0
    %225 = vmatpush2.msra.mxu0 0.0
    %226 = vmatprep.subr.mxu0 0.0
    %227 = vmatpush2.msra.mxu0 0.0
    %228 = vmatprep.subr.mxu0 0.0
    %229 = vmatpush2.msra.mxu0 0.0
    %230 = vmatprep.subr.mxu0 0.0
    %231 = vmatpush2.msra.mxu0 0.0
    %232 = vmatprep.subr.mxu0 0.0
    %233 = vmatpush2.msra.mxu0 0.0
    %234 = vmatprep.subr.mxu0 0.0
    %235 = vmatpush2.msra.mxu0 0.0
    %236 = vmatprep.subr.mxu0 0.0
    %237 = vmatpush2.msra.mxu0 0.0
    %238 = vmatprep.mubr.f32.mxu0 0.0
    %239 = vmatmul.mubr.f32.gmra.mxu0 %v101
    %v240 = vpop.f32.mrf.mxu0
    %v241 = vadd.f32 %v95, %v240
    %v242 = vpop.f32.mrf.mxu0
    %243 = vdwg.mxu0
    %vm244 = vcmp.gt.f32.partialorder %v170, 0.0
    %vm245 = vcmp.gt.f32.partialorder %v172, 0.0
    %vm246 = vcmp.gt.f32.partialorder %v241, 0.0
    %v247 = vmul.f32 %v170, 1.442695
    %v248 = vpow.pop %v247
    %v249 = vmul.f32 %v172, 1.442695
    %v250 = vpow.pop %v249
    %v251 = vmul.f32 %v241, 1.442695
    %v252 = vpow.pop %v251
    %v253 = vsub.f32 %v248, 1.0
    %v254 = vsub.f32 %v250, 1.0
    %v255 = vsub.f32 %v252, 1.0
    %v256 = vsel %vm244, %v170, %v253
    %v257 = vsel %vm245, %v172, %v254
    %v258 = vsel %vm246, %v241, %v255
    %v259 = vld [vmem:[#allocation7] sm:$0xff]
    %v260 = vld [vmem:[#allocation7 + $0x8] sm:$0xff]
    %v261 = vld [vmem:[#allocation7 + $0x10] sm:$0xff]
    %v262 = vld [vmem:[#allocation7 + $0x18] sm:$0xff]
    %v263 = vld [vmem:[#allocation7 + $0x20] sm:$0xff]
    %v264 = vld [vmem:[#allocation7 + $0x28] sm:$0xff]
    %v265 = vld [vmem:[#allocation7 + $0x30] sm:$0xff]
    %v266 = vld [vmem:[#allocation7 + $0x38] sm:$0xff]
    %v267 = vld [vmem:[#allocation7 + $0x40] sm:$0xff]
    %v268 = vld [vmem:[#allocation7 + $0x48] sm:$0xff]
    %v269 = vld [vmem:[#allocation7 + $0x50] sm:$0xff]
    %v270 = vld [vmem:[#allocation7 + $0x58] sm:$0xff]
    %v271 = vld [vmem:[#allocation7 + $0x60] sm:$0xff]
    %v272 = vld [vmem:[#allocation7 + $0x68] sm:$0xff]
    %v273 = vld [vmem:[#allocation7 + $0x70] sm:$0xff]
    %v274 = vld [vmem:[#allocation7 + $0x78] sm:$0xff]
    %v275 = vld [vmem:[#allocation7 + $0x80] sm:$0xff]
    %v276 = vld [vmem:[#allocation7 + $0x88] sm:$0xff]
    %v277 = vld [vmem:[#allocation7 + $0x90] sm:$0xff]
    %v278 = vld [vmem:[#allocation7 + $0x98] sm:$0xff]
    %v279 = vld [vmem:[#allocation7 + $0xa0] sm:$0xff]
    %v280 = vld [vmem:[#allocation7 + $0xa8] sm:$0xff]
    %v281 = vld [vmem:[#allocation7 + $0xb0] sm:$0xff]
    %v282 = vld [vmem:[#allocation7 + $0xb8] sm:$0xff]
    %v283 = vld [vmem:[#allocation7 + $0xc0] sm:$0xff]
    %v284 = vld [vmem:[#allocation7 + $0xc8] sm:$0xff]
    %v285 = vld [vmem:[#allocation7 + $0xd0] sm:$0xff]
    %v286 = vld [vmem:[#allocation7 + $0xd8] sm:$0xff]
    %v287 = vld [vmem:[#allocation7 + $0xe0] sm:$0xff]
    %v288 = vld [vmem:[#allocation7 + $0xe8] sm:$0xff]
    %v289 = vld [vmem:[#allocation7 + $0xf0] sm:$0xff]
    %v290 = vld [vmem:[#allocation7 + $0xf8] sm:$0xff]
    %v291 = vld [vmem:[#allocation7 + $0x100] sm:$0xff]
    %v292 = vld [vmem:[#allocation7 + $0x108] sm:$0xff]
    %v293 = vld [vmem:[#allocation7 + $0x110] sm:$0xff]
    %v294 = vld [vmem:[#allocation7 + $0x118] sm:$0xff]
    %v295 = vld [vmem:[#allocation7 + $0x120] sm:$0xff]
    %v296 = vld [vmem:[#allocation7 + $0x128] sm:$0xff]
    %v297 = vld [vmem:[#allocation7 + $0x130] sm:$0xff]
    %v298 = vld [vmem:[#allocation7 + $0x138] sm:$0xff]
    %v299 = vld [vmem:[#allocation7 + $0x140] sm:$0xff]
    %v300 = vld [vmem:[#allocation7 + $0x148] sm:$0xff]
    %v301 = vld [vmem:[#allocation7 + $0x150] sm:$0xff]
    %v302 = vld [vmem:[#allocation7 + $0x158] sm:$0xff]
    %v303 = vld [vmem:[#allocation7 + $0x160] sm:$0xff]
    %v304 = vld [vmem:[#allocation7 + $0x168] sm:$0xff]
    %v305 = vld [vmem:[#allocation7 + $0x170] sm:$0xff]
    %v306 = vld [vmem:[#allocation7 + $0x178] sm:$0xff]
    %307 = vmatprep.subr.mxu0 0.0
    %308 = vmatpush1.msra.mxu0 %v274
    %309 = vmatprep.subr.mxu0 0.0
    %310 = vmatpush1.msra.mxu0 %v273
    %311 = vmatprep.subr.mxu0 0.0
    %312 = vmatpush1.msra.mxu0 %v272
    %313 = vmatprep.subr.mxu0 0.0
    %314 = vmatpush1.msra.mxu0 %v271
    %315 = vmatprep.subr.mxu0 0.0
    %316 = vmatpush1.msra.mxu0 %v270
    %317 = vmatprep.subr.mxu0 0.0
    %318 = vmatpush1.msra.mxu0 %v269
    %319 = vmatprep.subr.mxu0 0.0
    %320 = vmatpush1.msra.mxu0 %v268
    %321 = vmatprep.subr.mxu0 0.0
    %322 = vmatpush1.msra.mxu0 %v267
    %323 = vmatprep.subr.mxu0 0.0
    %324 = vmatpush1.msra.mxu0 %v266
    %325 = vmatprep.subr.mxu0 0.0
    %326 = vmatpush1.msra.mxu0 %v265
    %327 = vmatprep.subr.mxu0 0.0
    %328 = vmatpush1.msra.mxu0 %v264
    %329 = vmatprep.subr.mxu0 0.0
    %330 = vmatpush1.msra.mxu0 %v263
    %331 = vmatprep.subr.mxu0 0.0
    %332 = vmatpush1.msra.mxu0 %v262
    %333 = vmatprep.subr.mxu0 0.0
    %334 = vmatpush1.msra.mxu0 %v261
    %335 = vmatprep.subr.mxu0 0.0
    %336 = vmatpush1.msra.mxu0 %v260
    %337 = vmatprep.subr.mxu0 0.0
    %338 = vmatpush1.msra.mxu0 %v259
    %339 = vmatprep.subr.mxu0 0.0
    %340 = vmatpush2.msra.mxu0 %v290
    %341 = vmatprep.subr.mxu0 0.0
    %342 = vmatpush2.msra.mxu0 %v289
    %343 = vmatprep.subr.mxu0 0.0
    %344 = vmatpush2.msra.mxu0 %v288
    %345 = vmatprep.subr.mxu0 0.0
    %346 = vmatpush2.msra.mxu0 %v287
    %347 = vmatprep.subr.mxu0 0.0
    %348 = vmatpush2.msra.mxu0 %v286
    %349 = vmatprep.subr.mxu0 0.0
    %350 = vmatpush2.msra.mxu0 %v285
    %351 = vmatprep.subr.mxu0 0.0
    %352 = vmatpush2.msra.mxu0 %v284
    %353 = vmatprep.subr.mxu0 0.0
    %354 = vmatpush2.msra.mxu0 %v283
    %355 = vmatprep.subr.mxu0 0.0
    %356 = vmatpush2.msra.mxu0 %v282
    %357 = vmatprep.subr.mxu0 0.0
    %358 = vmatpush2.msra.mxu0 %v281
    %359 = vmatprep.subr.mxu0 0.0
    %360 = vmatpush2.msra.mxu0 %v280
    %361 = vmatprep.subr.mxu0 0.0
    %362 = vmatpush2.msra.mxu0 %v279
    %363 = vmatprep.subr.mxu0 0.0
    %364 = vmatpush2.msra.mxu0 %v278
    %365 = vmatprep.subr.mxu0 0.0
    %366 = vmatpush2.msra.mxu0 %v277
    %367 = vmatprep.subr.mxu0 0.0
    %368 = vmatpush2.msra.mxu0 %v276
    %369 = vmatprep.subr.mxu0 0.0
    %370 = vmatpush2.msra.mxu0 %v275
    %371 = vmatprep.mubr.f32.mxu0 %v257
    %372 = vmatmul.mubr.f32.gmra.mxu0 %v256
    %v373 = vpop.f32.mrf.mxu0
    %v374 = vadd.f32 0.0, %v373
    %v375 = vpop.f32.mrf.mxu0
    %376 = vdwg.mxu0
    %377 = vmatprep.subr.mxu0 0.0
    %378 = vmatpush1.msra.mxu0 %v306
    %379 = vmatprep.subr.mxu0 0.0
    %380 = vmatpush1.msra.mxu0 %v305
    %381 = vmatprep.subr.mxu0 0.0
    %382 = vmatpush1.msra.mxu0 %v304
    %383 = vmatprep.subr.mxu0 0.0
    %384 = vmatpush1.msra.mxu0 %v303
    %385 = vmatprep.subr.mxu0 0.0
    %386 = vmatpush1.msra.mxu0 %v302
    %387 = vmatprep.subr.mxu0 0.0
    %388 = vmatpush1.msra.mxu0 %v301
    %389 = vmatprep.subr.mxu0 0.0
    %390 = vmatpush1.msra.mxu0 %v300
    %391 = vmatprep.subr.mxu0 0.0
    %392 = vmatpush1.msra.mxu0 %v299
    %393 = vmatprep.subr.mxu0 0.0
    %394 = vmatpush1.msra.mxu0 %v298
    %395 = vmatprep.subr.mxu0 0.0
    %396 = vmatpush1.msra.mxu0 %v297
    %397 = vmatprep.subr.mxu0 0.0
    %398 = vmatpush1.msra.mxu0 %v296
    %399 = vmatprep.subr.mxu0 0.0
    %400 = vmatpush1.msra.mxu0 %v295
    %401 = vmatprep.subr.mxu0 0.0
    %402 = vmatpush1.msra.mxu0 %v294
    %403 = vmatprep.subr.mxu0 0.0
    %404 = vmatpush1.msra.mxu0 %v293
    %405 = vmatprep.subr.mxu0 0.0
    %406 = vmatpush1.msra.mxu0 %v292
    %407 = vmatprep.subr.mxu0 0.0
    %408 = vmatpush1.msra.mxu0 %v291
    %409 = vmatprep.subr.mxu0 0.0
    %410 = vmatpush2.msra.mxu0 0.0
    %411 = vmatprep.subr.mxu0 0.0
    %412 = vmatpush2.msra.mxu0 0.0
    %413 = vmatprep.subr.mxu0 0.0
    %414 = vmatpush2.msra.mxu0 0.0
    %415 = vmatprep.subr.mxu0 0.0
    %416 = vmatpush2.msra.mxu0 0.0
    %417 = vmatprep.subr.mxu0 0.0
    %418 = vmatpush2.msra.mxu0 0.0
    %419 = vmatprep.subr.mxu0 0.0
    %420 = vmatpush2.msra.mxu0 0.0
    %421 = vmatprep.subr.mxu0 0.0
    %422 = vmatpush2.msra.mxu0 0.0
    %423 = vmatprep.subr.mxu0 0.0
    %424 = vmatpush2.msra.mxu0 0.0
    %425 = vmatprep.subr.mxu0 0.0
    %426 = vmatpush2.msra.mxu0 0.0
    %427 = vmatprep.subr.mxu0 0.0
    %428 = vmatpush2.msra.mxu0 0.0
    %429 = vmatprep.subr.mxu0 0.0
    %430 = vmatpush2.msra.mxu0 0.0
    %431 = vmatprep.subr.mxu0 0.0
    %432 = vmatpush2.msra.mxu0 0.0
    %433 = vmatprep.subr.mxu0 0.0
    %434 = vmatpush2.msra.mxu0 0.0
    %435 = vmatprep.subr.mxu0 0.0
    %436 = vmatpush2.msra.mxu0 0.0
    %437 = vmatprep.subr.mxu0 0.0
    %438 = vmatpush2.msra.mxu0 0.0
    %439 = vmatprep.subr.mxu0 0.0
    %440 = vmatpush2.msra.mxu0 0.0
    %441 = vmatprep.mubr.f32.mxu0 0.0
    %442 = vmatmul.mubr.f32.gmra.mxu0 %v258
    %v443 = vpop.f32.mrf.mxu0
    %v444 = vadd.f32 %v374, %v443
    %v445 = vpop.f32.mrf.mxu0
    %446 = vdwg.mxu0
    %447 = vst [vmem:[#allocation8] sm:$0xff] %v444
    // Predicated region
    $region30: #{tpu_custom_call.1} parent=1 // pred_check
      _
    $region31: #{tpu_custom_call.1} parent=1 // pred_check_branch
      %449 = sbr.rel (0) target = $region33
    $region32: #{tpu_custom_call.1} parent=1 // pred_region
      %s451 = ssub.s32 128, 128
      %452 = vsyncadd [#allocation4], %s451
      %s454 = sshll.u32 [#allocation8], 4
      %s455 = int_to_ptr.vmem [resolvable:$true] %s454
      %457 = dma.vmem_to_hbm [thread:$0]  %s455, 128, %s4, [#allocation4]
    $region33: #{tpu_custom_call.1} parent=1 // pred_fallthru
      _
    // Predicated region
    $region34: #{tpu_custom_call.1} parent=1 // pred_check
      _
    $region35: #{tpu_custom_call.1} parent=1 // pred_check_branch
      %459 = sbr.rel (0) target = $region37
    $region36: #{tpu_custom_call.1} parent=1 // pred_region
      %460 = dma.done [#allocation4], 128
    $region37: #{tpu_custom_call.1} parent=1 // pred_fallthru
      _
    %461 = vsyncpa [#allocation3], 1
    %462 = vsyncpa [#allocation6], 1
    %463 = vsyncpa [#allocation4], 1

</llo_original>
